<compile_context>
chip_gen: v5e
topology: v5e:2x2
jax: 0.10.0
libtpu: 0.0.40
codegen_flags: <defaults>
</compile_context>

<pallas_src>
import jax
import jax.numpy as jnp
from jax.experimental import pallas as pl
from jax.experimental.pallas import tpu as pltpu

STATE_SIZE = 64    # FrozenLake 8x8 -> 64 states (one-hot)
ACTION_SIZE = 4    # left / down / right / up
HIDDEN = 64
OUT_PAD = 128      # lane-dense padded fc3 width used *inside* the kernel only


# ----------------------------- kernel math -----------------------------------

def _mlp_core(x_bf16, w1, b1, w2, b2, w3p, b3p):
    """Shared MLP math: bf16 matmul operands, f32 accumulation + elementwise."""
    h1 = jnp.dot(x_bf16, w1, preferred_element_type=jnp.float32) + b1
    h1 = jnp.maximum(h1, 0.0)
    h2 = jnp.dot(h1.astype(jnp.bfloat16), w2, preferred_element_type=jnp.float32) + b2
    h2 = jnp.maximum(h2, 0.0)
    # fc3 with 128-lane padded output (extra lanes: zeros @ zeros + 0 bias).
    o = jnp.dot(h2.astype(jnp.bfloat16), w3p, preferred_element_type=jnp.float32) + b3p
    return o  # [TB, OUT_PAD] f32; only lanes [:ACTION_SIZE] are real Q-values


def _onehot_bf16(idx):
    """[TB, 1] int32 -> bf16 one-hot [TB, STATE_SIZE] built in VMEM."""
    tb = idx.shape[0]
    lane = jax.lax.broadcasted_iota(jnp.int32, (tb, STATE_SIZE), 1)
    return (lane == idx).astype(jnp.bfloat16)


# ----------------------------- kernels ---------------------------------------

def _dense_kernel(x_ref, w1_ref, b1_ref, w2_ref, b2_ref, w3_ref, b3_ref, o_ref):
    """Module forward on a dense [TILE_B, STATE_SIZE] (bf16) input tile."""
    o = _mlp_core(x_ref[...].astype(jnp.bfloat16),
                  w1_ref[...], b1_ref[...], w2_ref[...], b2_ref[...],
                  w3_ref[...], b3_ref[...])
    o_ref[...] = o[:, :ACTION_SIZE].astype(o_ref.dtype)


def _idx_kernel(idx_ref, w1_ref, b1_ref, w2_ref, b2_ref, w3_ref, b3_ref, o_ref):
    """Forward from [TILE_B, 1] int32 state indices (one-hot never crosses HBM)."""
    o = _mlp_core(_onehot_bf16(idx_ref[...]),
                  w1_ref[...], b1_ref[...], w2_ref[...], b2_ref[...],
                  w3_ref[...], b3_ref[...])
    o_ref[...] = o[:, :ACTION_SIZE].astype(o_ref.dtype)


def _greedy_kernel(idx_ref, w1_ref, b1_ref, w2_ref, b2_ref, w3_ref, b3_ref,
                   act_ref, maxq_ref):
    """Fused acting/target path: argmax_a Q(s,a) and max_a Q(s,a) per row."""
    o = _mlp_core(_onehot_bf16(idx_ref[...]),
                  w1_ref[...], b1_ref[...], w2_ref[...], b2_ref[...],
                  w3_ref[...], b3_ref[...])                       # [TB, OUT_PAD]
    lane = jax.lax.broadcasted_iota(jnp.int32, o.shape, 1)
    valid = lane < ACTION_SIZE
    qm = jnp.where(valid, o, -jnp.inf)
    maxq = jnp.max(qm, axis=-1, keepdims=True)                    # [TB, 1]
    # First (lowest-index) lane achieving the max -> matches torch.argmax ties.
    act = jnp.min(jnp.where((qm == maxq) & valid, lane, ACTION_SIZE),
                  axis=-1, keepdims=True)
    act_ref[...] = act.astype(act_ref.dtype)
    maxq_ref[...] = maxq.astype(maxq_ref.dtype)


# ----------------------------- launch plumbing --------------------------------

def _round_up(n, m):
    return ((n + m - 1) // m) * m


def _tile_b(batch):
    # Multiple of 16 (bf16 sublane tile).  Tiny batches: one tile.  Otherwise
    # target 2 balanced tiles so v7x's second TensorCore gets work while
    # v5e/v6e only pay ~2 grid steps of overhead; cap at 2048 rows.
    if batch <= 64:
        return _round_up(batch, 16)
    return min(_round_up(pl.cdiv(batch, 2), 16), 2048)


def _resident(shape):
    # Same block index every grid step -> weight/bias stays resident in VMEM.
    return pl.BlockSpec(shape, lambda i: tuple(0 for _ in shape))


def _launch(kernel, x_in, packed_params, out_defs):
    """out_defs: list of (num_cols, dtype) per kernel output."""
    w1, b1, w2, b2, w3p, b3p = packed_params
    batch, x_cols = x_in.shape
    tb = _tile_b(batch)
    n_tiles = pl.cdiv(batch, tb)   # ragged last block handled by Pallas masking

    out_shape = tuple(jax.ShapeDtypeStruct((batch, c), dt) for c, dt in out_defs)
    out_specs = tuple(pl.BlockSpec((tb, c), lambda i: (i, 0)) for c, _ in out_defs)
    single = len(out_defs) == 1
    if single:
        out_shape, out_specs = out_shape[0], out_specs[0]

    flops = 2 * batch * (STATE_SIZE * HIDDEN + HIDDEN * HIDDEN + HIDDEN * OUT_PAD)
    bytes_accessed = (x_in.size * x_in.dtype.itemsize
                      + sum(int(p.size) * p.dtype.itemsize for p in packed_params)
                      + sum(batch * c * jnp.dtype(dt).itemsize for c, dt in out_defs))

    return pl.pallas_call(
        kernel,
        out_shape=out_shape,
        grid_spec=pltpu.PrefetchScalarGridSpec(
            num_scalar_prefetch=0,
            grid=(n_tiles,),
            in_specs=[
                pl.BlockSpec((tb, x_cols), lambda i: (i, 0)),
                _resident(w1.shape), _resident(b1.shape),
                _resident(w2.shape), _resident(b2.shape),
                _resident(w3p.shape), _resident(b3p.shape),
            ],
            out_specs=out_specs,
        ),
        compiler_params=pltpu.CompilerParams(
            dimension_semantics=("parallel",)),   # v7x: shard batch over 2 TCs
        cost_estimate=pl.CostEstimate(
            flops=flops, transcendentals=0, bytes_accessed=bytes_accessed),
    )(x_in, w1, b1, w2, b2, w3p, b3p)


# ----------------------------- public wrappers --------------------------------

def qnetwork_forward(x, packed_params):
    """Module forward: x [B, STATE_SIZE] -> Q-values [B, ACTION_SIZE] f32."""
    x = x.astype(jnp.bfloat16)   # halve input DMA; kernel operands are bf16 anyway
    return _launch(_dense_kernel, x, packed_params, [(ACTION_SIZE, jnp.float32)])


def qnetwork_forward_from_indices(state_idx, packed_params):
    """Optimized FrozenLake path: int32 state indices [B] -> [B, ACTION_SIZE]."""
    idx2d = state_idx.astype(jnp.int32).reshape(-1, 1)
    return _launch(_idx_kernel, idx2d, packed_params, [(ACTION_SIZE, jnp.float32)])


def qnetwork_greedy_from_indices(state_idx, packed_params):
    """Fused acting/target path: indices [B] -> (argmax action [B] int32,
    max_a Q [B] f32).  Q-values never round-trip through HBM."""
    idx2d = state_idx.astype(jnp.int32).reshape(-1, 1)
    act, maxq = _launch(_greedy_kernel, idx2d, packed_params,
                        [(1, jnp.int32), (1, jnp.float32)])
    return act[:, 0], maxq[:, 0]


# ----------------------------- params ----------------------------------------

def init_params(key):
    """PyTorch nn.Linear default init U(-1/sqrt(fan_in), 1/sqrt(fan_in)).
    Weights stored [in, out] (transposed vs. torch) so kernels do x @ W + b."""
    def linear(k, fan_in, fan_out):
        kw, kb = jax.random.split(k)
        bound = 1.0 / jnp.sqrt(jnp.float32(fan_in))
        w = jax.random.uniform(kw, (fan_in, fan_out), jnp.float32, -bound, bound)
        b = jax.random.uniform(kb, (1, fan_out), jnp.float32, -bound, bound)
        return w, b

    k1, k2, k3 = jax.random.split(key, 3)
    w1, b1 = linear(k1, STATE_SIZE, HIDDEN)
    w2, b2 = linear(k2, HIDDEN, HIDDEN)
    w3, b3 = linear(k3, HIDDEN, ACTION_SIZE)
    return (w1, b1, w2, b2, w3, b3)


def pack_params(params):
    """bf16 weights (MXU operands), f32 biases; fc3 zero-padded to 128 lanes."""
    w1, b1, w2, b2, w3, b3 = params
    w3p = jnp.zeros((HIDDEN, OUT_PAD), jnp.float32).at[:, :ACTION_SIZE].set(w3)
    b3p = jnp.zeros((1, OUT_PAD), jnp.float32).at[:, :ACTION_SIZE].set(b3)
    return (w1.astype(jnp.bfloat16), b1.astype(jnp.float32),
            w2.astype(jnp.bfloat16), b2.astype(jnp.float32),
            w3p.astype(jnp.bfloat16), b3p.astype(jnp.float32))


def reference_forward(x, packed_params):
    """Pure-JAX reference using the same packed (bf16) params / cast sequence."""
    w1, b1, w2, b2, w3p, b3p = packed_params
    xb = x.astype(jnp.bfloat16)
    h1 = jnp.maximum(jnp.dot(xb, w1, preferred_element_type=jnp.float32) + b1, 0.0)
    h2 = jnp.maximum(jnp.dot(h1.astype(jnp.bfloat16), w2,
                             preferred_element_type=jnp.float32) + b2, 0.0)
    o = jnp.dot(h2.astype(jnp.bfloat16), w3p,
                preferred_element_type=jnp.float32) + b3p
    return o[:, :ACTION_SIZE]


# ----------------------------- demo / check -----------------------------------

if __name__ == "__main__":
    key = jax.random.PRNGKey(0)
    k_params, k_idx, k_big = jax.random.split(key, 3)

    params = pack_params(init_params(k_params))

    # Small batch of FrozenLake states (one-hot encoded).
    B = 2
    idx = jax.random.randint(k_idx, (B,), 0, STATE_SIZE)
    x = jax.nn.one_hot(idx, STATE_SIZE, dtype=jnp.float32)     # [2, 64]

    out_dense = jax.block_until_ready(qnetwork_forward(x, params))
    out_idx = jax.block_until_ready(qnetwork_forward_from_indices(idx, params))
    ref = reference_forward(x, params)

    assert out_dense.shape == (B, ACTION_SIZE)
    assert out_idx.shape == (B, ACTION_SIZE)
    assert jnp.allclose(out_dense, ref, atol=1e-4, rtol=1e-4), "dense path mismatch"
    assert jnp.allclose(out_idx, ref, atol=1e-4, rtol=1e-4), "index path mismatch"

    # Fused greedy (acting / target) path.
    act, maxq = qnetwork_greedy_from_indices(idx, params)
    act = jax.block_until_ready(act)
    ref_max = ref.max(axis=-1)
    assert act.shape == (B,) and maxq.shape == (B,)
    assert bool(jnp.all((act >= 0) & (act < ACTION_SIZE)))
    assert jnp.allclose(maxq, ref_max, atol=1e-4, rtol=1e-4), "maxQ mismatch"
    taken = jnp.take_along_axis(ref, act[:, None], axis=-1)[:, 0]
    assert jnp.allclose(taken, ref_max, atol=1e-4, rtol=1e-4), "argmax mismatch"

    # Larger (replay-buffer-sized) batch exercises the 2-tile grid + ragged block.
    BB = 1027
    idx_b = jax.random.randint(k_big, (BB,), 0, STATE_SIZE)
    x_b = jax.nn.one_hot(idx_b, STATE_SIZE, dtype=jnp.float32)
    out_b = jax.block_until_ready(qnetwork_forward_from_indices(idx_b, params))
    ref_b = reference_forward(x_b, params)
    assert out_b.shape == (BB, ACTION_SIZE)
    assert jnp.allclose(out_b, ref_b, atol=1e-4, rtol=1e-4), "batched path mismatch"

    act_b, maxq_b = qnetwork_greedy_from_indices(idx_b, params)
    jax.block_until_ready(act_b)
    assert jnp.allclose(maxq_b, ref_b.max(axis=-1), atol=1e-4, rtol=1e-4), \
        "batched greedy mismatch"

    print("KERNEL_OK")
</pallas_src>

<mosaic_0001>
module attributes {stable_mosaic.version = 11 : i64} {
  func.func @_dense_kernel(%arg0: i32, %arg1: memref<16x64xbf16, #tpu.memory_space<vmem>>, %arg2: memref<64x64xbf16, #tpu.memory_space<vmem>>, %arg3: memref<1x64xf32, #tpu.memory_space<vmem>>, %arg4: memref<64x64xbf16, #tpu.memory_space<vmem>>, %arg5: memref<1x64xf32, #tpu.memory_space<vmem>>, %arg6: memref<64x128xbf16, #tpu.memory_space<vmem>>, %arg7: memref<1x128xf32, #tpu.memory_space<vmem>>, %arg8: memref<16x4xf32, #tpu.memory_space<vmem>>) attributes {dimension_semantics = [#tpu.dimension_semantics<parallel>], iteration_bounds = array<i64: 1>, scalar_prefetch = 0 : i64, scratch_operands = 0 : i64, tpu.core_type = #tpu.core_type<tc>, window_params = [{transform_indices = @transform_0, window_bounds = array<i64: 16, 64>}, {pipeline_mode = #tpu.pipeline_mode<synchronous>, transform_indices = @transform_1, window_bounds = array<i64: 64, 64>}, {pipeline_mode = #tpu.pipeline_mode<synchronous>, transform_indices = @transform_2, window_bounds = array<i64: 1, 64>}, {pipeline_mode = #tpu.pipeline_mode<synchronous>, transform_indices = @transform_3, window_bounds = array<i64: 64, 64>}, {pipeline_mode = #tpu.pipeline_mode<synchronous>, transform_indices = @transform_4, window_bounds = array<i64: 1, 64>}, {pipeline_mode = #tpu.pipeline_mode<synchronous>, transform_indices = @transform_5, window_bounds = array<i64: 64, 128>}, {pipeline_mode = #tpu.pipeline_mode<synchronous>, transform_indices = @transform_6, window_bounds = array<i64: 1, 128>}, {transform_indices = @transform_7, window_bounds = array<i64: 16, 4>}]} {
    %c0 = arith.constant 0 : index
    %c0_0 = arith.constant 0 : index
    %0 = vector.load %arg1[%c0, %c0_0] : memref<16x64xbf16, #tpu.memory_space<vmem>>, vector<16x64xbf16>
    %c0_1 = arith.constant 0 : index
    %c0_2 = arith.constant 0 : index
    %1 = vector.load %arg2[%c0_1, %c0_2] : memref<64x64xbf16, #tpu.memory_space<vmem>>, vector<64x64xbf16>
    %c0_3 = arith.constant 0 : index
    %c0_4 = arith.constant 0 : index
    %2 = vector.load %arg3[%c0_3, %c0_4] : memref<1x64xf32, #tpu.memory_space<vmem>>, vector<1x64xf32>
    %c0_5 = arith.constant 0 : index
    %c0_6 = arith.constant 0 : index
    %3 = vector.load %arg4[%c0_5, %c0_6] : memref<64x64xbf16, #tpu.memory_space<vmem>>, vector<64x64xbf16>
    %c0_7 = arith.constant 0 : index
    %c0_8 = arith.constant 0 : index
    %4 = vector.load %arg5[%c0_7, %c0_8] : memref<1x64xf32, #tpu.memory_space<vmem>>, vector<1x64xf32>
    %c0_9 = arith.constant 0 : index
    %c0_10 = arith.constant 0 : index
    %5 = vector.load %arg6[%c0_9, %c0_10] : memref<64x128xbf16, #tpu.memory_space<vmem>>, vector<64x128xbf16>
    %c0_11 = arith.constant 0 : index
    %c0_12 = arith.constant 0 : index
    %6 = vector.load %arg7[%c0_11, %c0_12] : memref<1x128xf32, #tpu.memory_space<vmem>>, vector<1x128xf32>
    %cst = arith.constant dense<0.000000e+00> : vector<16x64xf32>
    %7 = tpu.matmul %0, %1, %cst {dimension_numbers = #tpu.dot_dimension_numbers<[1], [0], [0], [1], [0, 0, 1, 1], [], []>} : vector<16x64xbf16>, vector<64x64xbf16>, vector<16x64xf32> -> vector<16x64xf32>
    %8 = vector.broadcast %2 : vector<1x64xf32> to vector<16x64xf32>
    %9 = arith.addf %7, %8 : vector<16x64xf32>
    %cst_13 = arith.constant 0.000000e+00 : f32
    %10 = vector.broadcast %cst_13 : f32 to vector<16x64xf32>
    %11 = arith.maximumf %9, %10 : vector<16x64xf32>
    %12 = arith.truncf %11 : vector<16x64xf32> to vector<16x64xbf16>
    %cst_14 = arith.constant dense<0.000000e+00> : vector<16x64xf32>
    %13 = tpu.matmul %12, %3, %cst_14 {dimension_numbers = #tpu.dot_dimension_numbers<[1], [0], [0], [1], [0, 0, 1, 1], [], []>} : vector<16x64xbf16>, vector<64x64xbf16>, vector<16x64xf32> -> vector<16x64xf32>
    %14 = vector.broadcast %4 : vector<1x64xf32> to vector<16x64xf32>
    %15 = arith.addf %13, %14 : vector<16x64xf32>
    %cst_15 = arith.constant 0.000000e+00 : f32
    %16 = vector.broadcast %cst_15 : f32 to vector<16x64xf32>
    %17 = arith.maximumf %15, %16 : vector<16x64xf32>
    %18 = arith.truncf %17 : vector<16x64xf32> to vector<16x64xbf16>
    %cst_16 = arith.constant dense<0.000000e+00> : vector<16x128xf32>
    %19 = tpu.matmul %18, %5, %cst_16 {dimension_numbers = #tpu.dot_dimension_numbers<[1], [0], [0], [1], [0, 0, 1, 1], [], []>} : vector<16x64xbf16>, vector<64x128xbf16>, vector<16x128xf32> -> vector<16x128xf32>
    %20 = vector.broadcast %6 : vector<1x128xf32> to vector<16x128xf32>
    %21 = arith.addf %19, %20 : vector<16x128xf32>
    %22 = vector.extract_strided_slice %21 {offsets = [0, 0], sizes = [16, 4], strides = [1, 1]} : vector<16x128xf32> to vector<16x4xf32>
    %c0_17 = arith.constant 0 : index
    %c0_18 = arith.constant 0 : index
    %23 = vector.load %arg8[%c0_17, %c0_18] : memref<16x4xf32, #tpu.memory_space<vmem>>, vector<16x4xf32>
    tpu.vector_store %arg8[%c0_17, %c0_18], %22 {strides = array<i32>} : memref<16x4xf32, #tpu.memory_space<vmem>>, vector<16x4xf32>,
    return
  }
  func.func @transform_0(%arg0: i32) -> (i32, i32) {
    %c0_i32 = arith.constant 0 : i32
    %c0_i32_0 = arith.constant 0 : i32
    return %arg0, %c0_i32 : i32, i32
  }
  func.func @transform_1(%arg0: i32) -> (i32, i32) {
    %c0_i32 = arith.constant 0 : i32
    %c0_i32_0 = arith.constant 0 : i32
    %c0_i32_1 = arith.constant 0 : i32
    return %c0_i32, %c0_i32_0 : i32, i32
  }
  func.func @transform_2(%arg0: i32) -> (i32, i32) {
    %c0_i32 = arith.constant 0 : i32
    %c0_i32_0 = arith.constant 0 : i32
    %c0_i32_1 = arith.constant 0 : i32
    return %c0_i32, %c0_i32_0 : i32, i32
  }
  func.func @transform_3(%arg0: i32) -> (i32, i32) {
    %c0_i32 = arith.constant 0 : i32
    %c0_i32_0 = arith.constant 0 : i32
    %c0_i32_1 = arith.constant 0 : i32
    return %c0_i32, %c0_i32_0 : i32, i32
  }
  func.func @transform_4(%arg0: i32) -> (i32, i32) {
    %c0_i32 = arith.constant 0 : i32
    %c0_i32_0 = arith.constant 0 : i32
    %c0_i32_1 = arith.constant 0 : i32
    return %c0_i32, %c0_i32_0 : i32, i32
  }
  func.func @transform_5(%arg0: i32) -> (i32, i32) {
    %c0_i32 = arith.constant 0 : i32
    %c0_i32_0 = arith.constant 0 : i32
    %c0_i32_1 = arith.constant 0 : i32
    return %c0_i32, %c0_i32_0 : i32, i32
  }
  func.func @transform_6(%arg0: i32) -> (i32, i32) {
    %c0_i32 = arith.constant 0 : i32
    %c0_i32_0 = arith.constant 0 : i32
    %c0_i32_1 = arith.constant 0 : i32
    return %c0_i32, %c0_i32_0 : i32, i32
  }
  func.func @transform_7(%arg0: i32) -> (i32, i32) {
    %c0_i32 = arith.constant 0 : i32
    %c0_i32_0 = arith.constant 0 : i32
    return %arg0, %c0_i32 : i32, i32
  }
}

</mosaic_0001>

<llo_original>
// kernel: tpu_custom_call.1
$region0: #{tpu_custom_call.1}
  #allocation0 [shape = 'u32[]', space=smem, size = 0x4, offset = 0x4, fixed_abs, tag = 'smem constant byte address 0x4 - core index']
  #allocation1 [shape = 'u32[72,128]{1,0:T(1,128)}', space=vmem, size = 0x9000, scoped, tag = 'internal scratch']
  %s0 = inlined_call_operand.hbm [shape: bf16[2,64], index: 0, kind: input, shape index: {}]
  %s1 = inlined_call_operand.hbm [shape: bf16[64,64], index: 1, kind: input, shape index: {}]
  %s2 = inlined_call_operand.vmem [shape: f32[1,64], index: 2, kind: input, shape index: {}]
  %s3 = inlined_call_operand.hbm [shape: bf16[64,64], index: 3, kind: input, shape index: {}]
  %s4 = inlined_call_operand.vmem [shape: f32[1,64], index: 4, kind: input, shape index: {}]
  %s5 = inlined_call_operand.hbm [shape: bf16[64,128], index: 5, kind: input, shape index: {}]
  %s6 = inlined_call_operand.vmem [shape: f32[1,128], index: 6, kind: input, shape index: {}]
  %s7 = inlined_call_operand.hbm [shape: f32[2,4], index: 7, kind: output, shape index: {}]
  %s8 = sld [smem:[#allocation0]]
  $region54: #{tpu_custom_call.1} parent=0
    _
  %s10 = ssub.s32 1, %s8
  %s11 = scalar_select 0, %s10, %s8
  $region1: #{tpu_custom_call.1} parent=0
    #allocation2 [shape = 'u8[4096]{0}', space=vmem, size = 0x1000, scoped, tag = 'input window, operand 0, single buffered']
    #allocation3 [shape = 's32[1]{0}', space=sflag, size = 0x4, scoped, tag = 'scoped memory for tpu_custom_call.1']
    #allocation4 [shape = 's32[1]{0}', space=sflag, size = 0x4, scoped, tag = 'scoped memory for tpu_custom_call.1']
    #allocation5 [shape = 'u8[16384]{0}', space=vmem, size = 0x4000, scoped, tag = 'input window, operand 1, single buffered']
    #allocation6 [shape = 's32[1]{0}', space=sflag, size = 0x4, scoped, tag = 'scoped memory for tpu_custom_call.1']
    #allocation7 [shape = 'u8[16384]{0}', space=vmem, size = 0x4000, scoped, tag = 'input window, operand 3, single buffered']
    #allocation8 [shape = 'u8[16384]{0}', space=vmem, size = 0x4000, scoped, tag = 'input window, operand 5, single buffered']
    #allocation9 [shape = 's32[1]{0}', space=sflag, size = 0x4, scoped, tag = 'scoped memory for tpu_custom_call.1']
    #allocation10 [shape = 'u8[8192]{0}', space=vmem, size = 0x2000, scoped, tag = 'output window, operand 0, single buffered']
    %12 = vsyncpa [#allocation3], 0
    %13 = vsyncpa [#allocation6], 0
    %14 = vsyncpa [#allocation9], 0
    %15 = vsyncpa [#allocation4], 0
    // Predicated region
    $region2: #{tpu_custom_call.1} parent=1 // pred_check
      _
    $region3: #{tpu_custom_call.1} parent=1 // pred_check_branch
      %17 = sbr.rel (0) target = $region5
    $region4: #{tpu_custom_call.1} parent=1 // pred_region
      %19 = vsyncadd [#allocation3], 112
      %s20 = sshll.u32 %s0, 4
      %s21 = int_to_ptr.hbm [resolvable:$true] %s20
      %s22 = sshll.u32 [#allocation2], 4
      %s23 = int_to_ptr.vmem [resolvable:$true] %s22
      %28 = dma.hbm_to_vmem [thread:$0]  %s21, 16, %s23, [#allocation3], 16, 16, 1
    $region5: #{tpu_custom_call.1} parent=1 // pred_fallthru
      _
    // Predicated region
    $region6: #{tpu_custom_call.1} parent=1 // pred_check
      _
    $region7: #{tpu_custom_call.1} parent=1 // pred_check_branch
      %30 = sbr.rel (0) target = $region9
    $region8: #{tpu_custom_call.1} parent=1 // pred_region
      %32 = vsyncadd [#allocation6], 0
      %s33 = sshll.u32 %s1, 4
      %s34 = int_to_ptr.hbm [resolvable:$true] %s33
      %s35 = sshll.u32 [#allocation5], 4
      %s36 = int_to_ptr.vmem [resolvable:$true] %s35
      %41 = dma.hbm_to_vmem [thread:$0]  %s34, 512, %s36, [#allocation6], 64, 64, 4
    $region9: #{tpu_custom_call.1} parent=1 // pred_fallthru
      _
    // Predicated region
    $region10: #{tpu_custom_call.1} parent=1 // pred_check
      _
    $region11: #{tpu_custom_call.1} parent=1 // pred_check_branch
      %43 = sbr.rel (0) target = $region13
    $region12: #{tpu_custom_call.1} parent=1 // pred_region
      _
    $region13: #{tpu_custom_call.1} parent=1 // pred_fallthru
      _
    // Predicated region
    $region14: #{tpu_custom_call.1} parent=1 // pred_check
      _
    $region15: #{tpu_custom_call.1} parent=1 // pred_check_branch
      %45 = sbr.rel (0) target = $region17
    $region16: #{tpu_custom_call.1} parent=1 // pred_region
      %47 = vsyncadd [#allocation6], 0
      %s48 = sshll.u32 %s3, 4
      %s49 = int_to_ptr.hbm [resolvable:$true] %s48
      %s50 = sshll.u32 [#allocation7], 4
      %s51 = int_to_ptr.vmem [resolvable:$true] %s50
      %56 = dma.hbm_to_vmem [thread:$0]  %s49, 512, %s51, [#allocation6], 64, 64, 4
    $region17: #{tpu_custom_call.1} parent=1 // pred_fallthru
      _
    // Predicated region
    $region18: #{tpu_custom_call.1} parent=1 // pred_check
      _
    $region19: #{tpu_custom_call.1} parent=1 // pred_check_branch
      %58 = sbr.rel (0) target = $region21
    $region20: #{tpu_custom_call.1} parent=1 // pred_region
      _
    $region21: #{tpu_custom_call.1} parent=1 // pred_fallthru
      _
    // Predicated region
    $region22: #{tpu_custom_call.1} parent=1 // pred_check
      _
    $region23: #{tpu_custom_call.1} parent=1 // pred_check_branch
      %60 = sbr.rel (0) target = $region25
    $region24: #{tpu_custom_call.1} parent=1 // pred_region
      %62 = vsyncadd [#allocation9], 0
      %s63 = sshll.u32 %s5, 4
      %s64 = int_to_ptr.hbm [resolvable:$true] %s63
      %s65 = sshll.u32 [#allocation8], 4
      %s66 = int_to_ptr.vmem [resolvable:$true] %s65
      %71 = dma.hbm_to_vmem [thread:$0]  %s64, 512, %s66, [#allocation9], 64, 64, 4
    $region25: #{tpu_custom_call.1} parent=1 // pred_fallthru
      _
    // Predicated region
    $region26: #{tpu_custom_call.1} parent=1 // pred_check
      _
    $region27: #{tpu_custom_call.1} parent=1 // pred_check_branch
      %73 = sbr.rel (0) target = $region29
    $region28: #{tpu_custom_call.1} parent=1 // pred_region
      _
    $region29: #{tpu_custom_call.1} parent=1 // pred_fallthru
      _
    // Predicated region
    $region30: #{tpu_custom_call.1} parent=1 // pred_check
      _
    $region31: #{tpu_custom_call.1} parent=1 // pred_check_branch
      %75 = sbr.rel (0) target = $region33
    $region32: #{tpu_custom_call.1} parent=1 // pred_region
      %77 = dma.done [#allocation3], 128
    $region33: #{tpu_custom_call.1} parent=1 // pred_fallthru
      _
    // Predicated region
    $region34: #{tpu_custom_call.1} parent=1 // pred_check
      _
    $region35: #{tpu_custom_call.1} parent=1 // pred_check_branch
      %79 = sbr.rel (0) target = $region37
    $region36: #{tpu_custom_call.1} parent=1 // pred_region
      %81 = dma.done [#allocation6], 512
    $region37: #{tpu_custom_call.1} parent=1 // pred_fallthru
      _
    // Predicated region
    $region38: #{tpu_custom_call.1} parent=1 // pred_check
      _
    $region39: #{tpu_custom_call.1} parent=1 // pred_check_branch
      %83 = sbr.rel (0) target = $region41
    $region40: #{tpu_custom_call.1} parent=1 // pred_region
      %85 = dma.done [#allocation6], 512
    $region41: #{tpu_custom_call.1} parent=1 // pred_fallthru
      _
    // Predicated region
    $region42: #{tpu_custom_call.1} parent=1 // pred_check
      _
    $region43: #{tpu_custom_call.1} parent=1 // pred_check_branch
      %87 = sbr.rel (0) target = $region45
    $region44: #{tpu_custom_call.1} parent=1 // pred_region
      %89 = dma.done [#allocation9], 512
    $region45: #{tpu_custom_call.1} parent=1 // pred_fallthru
      _
    %v91 = vld [vmem:[#allocation2] sm:$0x1]
    %v92 = vld [vmem:[#allocation2 + $0x1] sm:$0x1]
    %v93 = vld [vmem:[#allocation2 + $0x2] sm:$0x1]
    %v94 = vld [vmem:[#allocation2 + $0x3] sm:$0x1]
    %v95 = vld [vmem:[#allocation2 + $0x4] sm:$0x1]
    %v96 = vld [vmem:[#allocation2 + $0x5] sm:$0x1]
    %v97 = vld [vmem:[#allocation2 + $0x6] sm:$0x1]
    %v98 = vld [vmem:[#allocation2 + $0x7] sm:$0x1]
    %v99 = vld [vmem:[#allocation5] sm:$0xf]
    %v100 = vld [vmem:[#allocation5 + $0x4] sm:$0xf]
    %v101 = vld [vmem:[#allocation5 + $0x8] sm:$0xf]
    %v102 = vld [vmem:[#allocation5 + $0xc] sm:$0xf]
    %v103 = vld [vmem:[#allocation5 + $0x10] sm:$0xf]
    %v104 = vld [vmem:[#allocation5 + $0x14] sm:$0xf]
    %v105 = vld [vmem:[#allocation5 + $0x18] sm:$0xf]
    %v106 = vld [vmem:[#allocation5 + $0x1c] sm:$0xf]
    %v107 = vld [vmem:[%s2] sm:$0x1]
    %v108 = vld [vmem:[#allocation7] sm:$0xf]
    %v109 = vld [vmem:[#allocation7 + $0x4] sm:$0xf]
    %v110 = vld [vmem:[#allocation7 + $0x8] sm:$0xf]
    %v111 = vld [vmem:[#allocation7 + $0xc] sm:$0xf]
    %v112 = vld [vmem:[#allocation7 + $0x10] sm:$0xf]
    %v113 = vld [vmem:[#allocation7 + $0x14] sm:$0xf]
    %v114 = vld [vmem:[#allocation7 + $0x18] sm:$0xf]
    %v115 = vld [vmem:[#allocation7 + $0x1c] sm:$0xf]
    %v116 = vld [vmem:[%s4] sm:$0x1]
    %v117 = vld [vmem:[#allocation8] sm:$0xf]
    %v118 = vld [vmem:[#allocation8 + $0x4] sm:$0xf]
    %v119 = vld [vmem:[#allocation8 + $0x8] sm:$0xf]
    %v120 = vld [vmem:[#allocation8 + $0xc] sm:$0xf]
    %v121 = vld [vmem:[#allocation8 + $0x10] sm:$0xf]
    %v122 = vld [vmem:[#allocation8 + $0x14] sm:$0xf]
    %v123 = vld [vmem:[#allocation8 + $0x18] sm:$0xf]
    %v124 = vld [vmem:[#allocation8 + $0x1c] sm:$0xf]
    %v125 = vld [vmem:[%s6] sm:$0x1]
    %v127 = vperm.slane %v107, 0
    %130 = vst [vmem:[#allocation1] ss:$9 sm:$0xff] %v91
    %s132 = scalar_lea.vmem [#allocation1], 1
    %133 = vst [vmem:[%s132] ss:$9 sm:$0xff] %v92
    %s135 = scalar_lea.vmem [#allocation1], 2
    %136 = vst [vmem:[%s135] ss:$9 sm:$0xff] %v93
    %s138 = scalar_lea.vmem [#allocation1], 3
    %139 = vst [vmem:[%s138] ss:$9 sm:$0xff] %v94
    %s141 = scalar_lea.vmem [#allocation1], 4
    %142 = vst [vmem:[%s141] ss:$9 sm:$0xff] %v95
    %s144 = scalar_lea.vmem [#allocation1], 5
    %145 = vst [vmem:[%s144] ss:$9 sm:$0xff] %v96
    %s147 = scalar_lea.vmem [#allocation1], 6
    %148 = vst [vmem:[%s147] ss:$9 sm:$0xff] %v97
    %s150 = scalar_lea.vmem [#allocation1], 7
    %151 = vst [vmem:[%s150] ss:$9 sm:$0xff] %v98
    %v152 = vld [vmem:[#allocation1] sm:$0xff]
    %v161 = vunpack.c.l.b16 %v99
    %v162 = vunpack.c.l.b16 %v100
    %v163 = vunpack.c.l.b16 %v101
    %v164 = vunpack.c.l.b16 %v102
    %v165 = vunpack.c.l.b16 %v103
    %v166 = vunpack.c.l.b16 %v104
    %v167 = vunpack.c.l.b16 %v105
    %v168 = vunpack.c.l.b16 %v106
    %v169 = vpack.c.b16 %v162, %v161
    %v170 = vpack.c.b16 %v164, %v163
    %v171 = vpack.c.b16 %v166, %v165
    %v172 = vpack.c.b16 %v168, %v167
    %vm177 = vcmask 523264
    %v178 = vsel %vm177, %v152, 0
    %180 = vmatpush.bf16.msra.mxu0 0
    %181 = vmatpush.bf16.msra.mxu0 0
    %182 = vmatpush.bf16.msra.mxu0 0
    %183 = vmatpush.bf16.msra.mxu0 0
    %184 = vmatpush.bf16.msra.mxu0 %v172
    %185 = vmatpush.bf16.msra.mxu0 %v171
    %186 = vmatpush.bf16.msra.mxu0 %v170
    %187 = vmatpush.bf16.msra.mxu0 %v169
    %188 = vmatmul.bf16.gmra.mxu0 %v178
    %v189 = vpop.f32.mrf.mxu0
    %v190 = vadd.f32 %v127, %v189
    %v191 = vpop.f32.mrf.mxu0
    %v192 = vadd.f32 %v127, %v191
    %193 = vdwg.mxu0
    %v194 = vmax.f32 %v190, 0.0
    %v195 = vmax.f32 %v192, 0.0
    %v196 = vpack.c.bf16 %v195, %v194
    %v198 = vperm.slane %v116, 0
    %v208 = vunpack.c.l.b16 %v108
    %v209 = vunpack.c.l.b16 %v109
    %v210 = vunpack.c.l.b16 %v110
    %v211 = vunpack.c.l.b16 %v111
    %v212 = vunpack.c.l.b16 %v112
    %v213 = vunpack.c.l.b16 %v113
    %v214 = vunpack.c.l.b16 %v114
    %v215 = vunpack.c.l.b16 %v115
    %v216 = vpack.c.b16 %v209, %v208
    %v217 = vpack.c.b16 %v211, %v210
    %v218 = vpack.c.b16 %v213, %v212
    %v219 = vpack.c.b16 %v215, %v214
    %v225 = vsel %vm177, %v196, 0
    %227 = vmatpush.bf16.msra.mxu0 0
    %228 = vmatpush.bf16.msra.mxu0 0
    %229 = vmatpush.bf16.msra.mxu0 0
    %230 = vmatpush.bf16.msra.mxu0 0
    %231 = vmatpush.bf16.msra.mxu0 %v219
    %232 = vmatpush.bf16.msra.mxu0 %v218
    %233 = vmatpush.bf16.msra.mxu0 %v217
    %234 = vmatpush.bf16.msra.mxu0 %v216
    %235 = vmatmul.bf16.gmra.mxu0 %v225
    %v236 = vpop.f32.mrf.mxu0
    %v237 = vadd.f32 %v198, %v236
    %v238 = vpop.f32.mrf.mxu0
    %v239 = vadd.f32 %v198, %v238
    %240 = vdwg.mxu0
    %v241 = vmax.f32 %v237, 0.0
    %v242 = vmax.f32 %v239, 0.0
    %v243 = vpack.c.bf16 %v242, %v241
    %v245 = vperm.slane %v125, 0
    %v255 = vunpack.c.l.b16 %v117
    %v256 = vunpack.c.l.b16 %v118
    %v257 = vunpack.c.l.b16 %v119
    %v258 = vunpack.c.l.b16 %v120
    %v259 = vunpack.c.l.b16 %v121
    %v260 = vunpack.c.l.b16 %v122
    %v261 = vunpack.c.l.b16 %v123
    %v262 = vunpack.c.l.b16 %v124
    %v263 = vpack.c.b16 %v256, %v255
    %v264 = vpack.c.b16 %v258, %v257
    %v265 = vpack.c.b16 %v260, %v259
    %v266 = vpack.c.b16 %v262, %v261
    %v272 = vsel %vm177, %v243, 0
    %274 = vmatpush.bf16.msra.mxu0 0
    %275 = vmatpush.bf16.msra.mxu0 0
    %276 = vmatpush.bf16.msra.mxu0 0
    %277 = vmatpush.bf16.msra.mxu0 0
    %278 = vmatpush.bf16.msra.mxu0 %v266
    %279 = vmatpush.bf16.msra.mxu0 %v265
    %280 = vmatpush.bf16.msra.mxu0 %v264
    %281 = vmatpush.bf16.msra.mxu0 %v263
    %282 = vmatmul.bf16.gmra.mxu0 %v272
    %v283 = vpop.f32.mrf.mxu0
    %v284 = vadd.f32 %v245, %v283
    %v285 = vpop.f32.mrf.mxu0
    %v286 = vadd.f32 %v245, %v285
    %287 = vdwg.mxu0
    %vm288 = vcmask 31744
    %289 = vst.msk [vmem:[#allocation10] sm:$0xff] %vm288, %v284
    %290 = vst.msk [vmem:[#allocation10 + $0x8] sm:$0xff] %vm288, %v286
    // Predicated region
    $region46: #{tpu_custom_call.1} parent=1 // pred_check
      _
    $region47: #{tpu_custom_call.1} parent=1 // pred_check_branch
      %292 = sbr.rel (0) target = $region49
    $region48: #{tpu_custom_call.1} parent=1 // pred_region
      %294 = vsyncadd [#allocation4], 224
      %s295 = sshll.u32 [#allocation10], 4
      %s296 = int_to_ptr.vmem [resolvable:$true] %s295
      %s297 = sshll.u32 %s7, 4
      %s298 = int_to_ptr.hbm [resolvable:$true] %s297
      %303 = dma.vmem_to_hbm [thread:$0]  %s296, 32, %s298, [#allocation4], 32, 32, 2
    $region49: #{tpu_custom_call.1} parent=1 // pred_fallthru
      _
    // Predicated region
    $region50: #{tpu_custom_call.1} parent=1 // pred_check
      _
    $region51: #{tpu_custom_call.1} parent=1 // pred_check_branch
      %305 = sbr.rel (0) target = $region53
    $region52: #{tpu_custom_call.1} parent=1 // pred_region
      %307 = dma.done [#allocation4], 256
    $region53: #{tpu_custom_call.1} parent=1 // pred_fallthru
      _
    %308 = vsyncpa [#allocation3], 1
    %309 = vsyncpa [#allocation6], 1
    %310 = vsyncpa [#allocation9], 1
    %311 = vsyncpa [#allocation4], 1

</llo_original>
